<compile_context>
chip_gen: v7x
topology: tpu7x:2x2x1
jax: 0.10.0
libtpu: 0.0.40
codegen_flags: <defaults>
</compile_context>

<pallas_src>
import math

import jax
import jax.numpy as jnp
import numpy as np
from jax.experimental import pallas as pl
from jax.experimental.pallas import tpu as pltpu


def _cdiv(a, b):
    return -(-a // b)


def _vmem_capacity_bytes():
    try:
        return int(pltpu.get_tpu_info().vmem_capacity_bytes)
    except Exception:
        return 64 * 1024 * 1024  # conservative (v7x-sized) fallback


def _num_tensorcores():
    """Best-effort TensorCores-per-chip detection (megacore / v7x). Defaults
    to 1 (single-TC v5e/v6e behaviour) when detection is inconclusive."""
    try:
        info = pltpu.get_tpu_info()
        for attr in ("num_tensorcores", "tensorcore_count", "num_cores",
                     "cores_per_chip"):
            val = getattr(info, attr, None)
            if isinstance(val, int) and val > 0:
                return val
    except Exception:
        pass
    try:
        kind = jax.devices()[0].device_kind.lower()
        if "v7" in kind or "v5p" in kind or "v4" in kind:
            return 2
    except Exception:
        pass
    return 1


def _normalize_pad(pad):
    """Replicates Reflect.__init__ pad normalization exactly (incl. reversal)."""
    if isinstance(pad, int):
        pad = (pad,) * 2
    full_pad = []
    for n_elems in pad:
        if isinstance(n_elems, (tuple, list)):
            full_pad += [n_elems[0], n_elems[1]]
        elif isinstance(n_elems, int):
            full_pad += [n_elems, n_elems]
        else:
            raise ValueError("Expected int or tuple of ints in pad.")
    return tuple(full_pad[::-1])


def _make_plane_kernel(H, W, w_left, w_right, h_top, h_bot):
    """Kernel over one channel block holding whole planes: (cb,H,W)->(cb,Ho,Wo)."""
    Ho = H + h_top + h_bot
    Wo = W + w_left + w_right

    def kernel(x_ref, o_ref):
        # 1) Interior: one large dense copy.
        o_ref[:, h_top:h_top + H, w_left:w_left + W] = x_ref[...]

        # 2) Left / right reflected column strips: one batched store per side
        #    (reflect excludes the edge column: out col (w_left-k) <- x col k).
        if w_left > 0:
            o_ref[:, h_top:h_top + H, 0:w_left] = jnp.concatenate(
                [x_ref[:, :, k:k + 1] for k in range(w_left, 0, -1)], axis=2)
        if w_right > 0:
            o_ref[:, h_top:h_top + H, w_left + W:Wo] = jnp.concatenate(
                [x_ref[:, :, W - 1 - k:W - k] for k in range(1, w_right + 1)],
                axis=2)

        # 3) Top / bottom reflected rows: one batched full-width copy per side
        #    of already-written output rows; corners come along for free.
        if h_top > 0:
            o_ref[:, 0:h_top, :] = jnp.concatenate(
                [o_ref[:, h_top + k:h_top + k + 1, :]
                 for k in range(h_top, 0, -1)], axis=1)
        if h_bot > 0:
            src0 = h_top + H - 1
            o_ref[:, h_top + H:Ho, :] = jnp.concatenate(
                [o_ref[:, src0 - k:src0 - k + 1, :]
                 for k in range(1, h_bot + 1)], axis=1)

    return kernel


def _make_row_kernel(W, w_left, w_right):
    """Row-wise fallback kernel: W reflection only (H reflection is done by the
    scalar-prefetched source-row index map)."""

    def kernel(src_rows_ref, x_ref, o_ref):
        del src_rows_ref  # consumed by the index maps only
        pieces = [x_ref[:, :, k:k + 1] for k in range(w_left, 0, -1)]
        pieces.append(x_ref[...])
        pieces += [x_ref[:, :, W - 1 - k:W - k] for k in range(1, w_right + 1)]
        o_ref[...] = jnp.concatenate(pieces, axis=2) if len(pieces) > 1 else x_ref[...]

    return kernel


def reflect_pad(x, pad, *, channel_block=None, _force_rowwise=False):
    """Replicates pytorch_retrieve Reflect(pad).forward(x): reflect-pads the
    last two dims of an NCHW-style tensor."""
    full_pad = _normalize_pad(pad)
    if len(full_pad) != 4:
        raise NotImplementedError(
            "This kernel implements reflect padding of the last two dims only.")
    w_left, w_right, h_top, h_bot = (int(p) for p in full_pad)

    if x.ndim < 2:
        raise ValueError("Input must have at least 2 dims.")
    H, W = int(x.shape[-2]), int(x.shape[-1])
    # PyTorch reflect requires 0 <= pad < dim.
    if not (0 <= h_top < H and 0 <= h_bot < H and 0 <= w_left < W and 0 <= w_right < W):
        raise ValueError(
            f"Reflect padding {full_pad} must be non-negative and smaller than "
            f"the padded dims (H={H}, W={W}).")

    lead = x.shape[:-2]
    nc = int(math.prod(lead)) if lead else 1
    Ho = H + h_top + h_bot
    Wo = W + w_left + w_right
    itemsize = jnp.dtype(x.dtype).itemsize

    x3 = x.reshape(nc, H, W)  # free: no layout change, channels stay leading.

    capacity = _vmem_capacity_bytes()
    budget = min(max(capacity * 3 // 8, 12 << 20), 40 << 20)
    per_chan_bytes = 2 * (H * W + Ho * Wo) * itemsize  # double-buffered in + out
    n_tc = _num_tensorcores()

    cost = pl.CostEstimate(
        flops=0, transcendentals=0,
        bytes_accessed=(H * W + Ho * Wo) * nc * itemsize)

    # Fall back to the row-wise kernel only if even a single plane pair does
    # not fit physical VMEM (with headroom); otherwise the plane path shrinks
    # the channel block (down to 1) to respect the budget.
    use_rowwise = _force_rowwise or per_chan_bytes > capacity - (8 << 20)

    if not use_rowwise:
        cb = min(nc, max(1, budget // per_chan_bytes))
        if channel_block is None:
            if n_tc >= 2:
                # Target >= 2 blocks per TensorCore so each core overlaps DMAs.
                cb = min(cb, max(1, _cdiv(nc, 2 * n_tc)))
        else:
            cb = max(1, min(int(channel_block), nc))
        footprint = per_chan_bytes * cb
        vmem_limit = int(min(capacity, max(32 << 20, footprint + (4 << 20))))

        out3 = pl.pallas_call(
            _make_plane_kernel(H, W, w_left, w_right, h_top, h_bot),
            out_shape=jax.ShapeDtypeStruct((nc, Ho, Wo), x.dtype),
            grid=(pl.cdiv(nc, cb),),
            in_specs=[pl.BlockSpec((cb, H, W), lambda i: (i, 0, 0))],
            out_specs=pl.BlockSpec((cb, Ho, Wo), lambda i: (i, 0, 0)),
            compiler_params=pltpu.CompilerParams(
                dimension_semantics=("parallel",),
                vmem_limit_bytes=vmem_limit,
            ),
            cost_estimate=cost,
        )(x3)
    else:
        # --- Row-wise fallback for planes too large to hold whole in VMEM ---
        # H reflection folded into a scalar-prefetched source-row index map;
        # the kernel body only performs the W reflection, so VMEM per step is
        # constant w.r.t. the image size.
        # TODO(synk): use multi-row tiles with a halo window to amortize the
        # ~0.35us per-grid-step overhead for very large images.
        row_bytes = 2 * (W + Wo) * itemsize
        cb = max(1, min(nc, budget // max(1, row_bytes)))
        src = np.empty((Ho,), dtype=np.int32)
        for j in range(Ho):
            if j < h_top:
                src[j] = h_top - j
            elif j < h_top + H:
                src[j] = j - h_top
            else:
                src[j] = 2 * (H - 1) - (j - h_top)
        src_rows = jnp.asarray(src)

        out3 = pl.pallas_call(
            _make_row_kernel(W, w_left, w_right),
            out_shape=jax.ShapeDtypeStruct((nc, Ho, Wo), x.dtype),
            grid_spec=pltpu.PrefetchScalarGridSpec(
                num_scalar_prefetch=1,
                grid=(pl.cdiv(nc, cb), Ho),
                in_specs=[pl.BlockSpec(
                    (cb, 1, W), lambda c, j, src_ref: (c, src_ref[j], 0))],
                out_specs=pl.BlockSpec(
                    (cb, 1, Wo), lambda c, j, src_ref: (c, j, 0)),
            ),
            compiler_params=pltpu.CompilerParams(
                dimension_semantics=("parallel", "arbitrary")),
            cost_estimate=cost,
        )(src_rows, x3)

    return out3.reshape(*lead, Ho, Wo)


if __name__ == "__main__":
    key = jax.random.PRNGKey(0)

    # 1) Primary case: NCHW, symmetric int pad (the module's typical use).
    x = jax.random.normal(key, (2, 4, 16, 16), dtype=jnp.float32)
    y = jax.block_until_ready(reflect_pad(x, 2))
    ref = jnp.pad(x, ((0, 0), (0, 0), (2, 2), (2, 2)), mode="reflect")
    assert y.shape == (2, 4, 20, 20), y.shape
    assert y.dtype == x.dtype
    assert jnp.allclose(y, ref), "mismatch vs reference reflect pad (symmetric)"

    # 2) Asymmetric pad: exercises the module's exact pad normalization
    #    (reversal). pad=((1,2),(3,1)) -> full_pad=(1,3,2,1) -> w_l=1,w_r=3,
    #    h_t=2,h_b=1. Also exercises in-block reads of already-written rows.
    y2 = jax.block_until_ready(reflect_pad(x, ((1, 2), (3, 1))))
    ref2 = jnp.pad(x, ((0, 0), (0, 0), (2, 1), (1, 3)), mode="reflect")
    assert y2.shape == ref2.shape, (y2.shape, ref2.shape)
    assert jnp.allclose(y2, ref2), "mismatch vs reference reflect pad (asymmetric)"

    # 3) Many channels: multi-step (megacore-aware) channel-blocked grid.
    x3 = jax.random.normal(key, (2, 160, 16, 16), dtype=jnp.float32)
    y3 = jax.block_until_ready(reflect_pad(x3, 1))
    ref3 = jnp.pad(x3, ((0, 0), (0, 0), (1, 1), (1, 1)), mode="reflect")
    assert y3.shape == (2, 160, 18, 18), y3.shape
    assert jnp.allclose(y3, ref3), "mismatch vs reference reflect pad (chunked)"

    # 4) Ragged final channel block (nc=10, cb=4): relies on Pallas's
    #    partial-block handling instead of padding/slicing the channel axis.
    x4 = jax.random.normal(key, (2, 5, 16, 16), dtype=jnp.float32)
    y4 = jax.block_until_ready(reflect_pad(x4, 2, channel_block=4))
    ref4 = jnp.pad(x4, ((0, 0), (0, 0), (2, 2), (2, 2)), mode="reflect")
    assert y4.shape == ref4.shape, (y4.shape, ref4.shape)
    assert jnp.allclose(y4, ref4), "mismatch vs reference reflect pad (ragged block)"

    print("KERNEL_OK")
</pallas_src>

<mosaic_0001>
module attributes {stable_mosaic.version = 11 : i64} {
  func.func @kernel(%arg0: i32, %arg1: memref<8x16x16xf32, #tpu.memory_space<vmem>>, %arg2: memref<8x20x20xf32, #tpu.memory_space<vmem>>) attributes {dimension_semantics = [#tpu.dimension_semantics<parallel>], iteration_bounds = array<i64: 1>, scalar_prefetch = 0 : i64, scratch_operands = 0 : i64, tpu.core_type = #tpu.core_type<tc>, window_params = [{transform_indices = @transform_0, window_bounds = array<i64: 8, 16, 16>}, {transform_indices = @transform_1, window_bounds = array<i64: 8, 20, 20>}]} {
    %c0 = arith.constant 0 : index
    %c0_0 = arith.constant 0 : index
    %c0_1 = arith.constant 0 : index
    %0 = vector.load %arg1[%c0, %c0_0, %c0_1] : memref<8x16x16xf32, #tpu.memory_space<vmem>>, vector<8x16x16xf32>
    %c0_2 = arith.constant 0 : index
    %c2 = arith.constant 2 : index
    %c2_3 = arith.constant 2 : index
    %1 = vector.load %arg2[%c0_2, %c2, %c2_3] : memref<8x20x20xf32, #tpu.memory_space<vmem>>, vector<8x16x16xf32>
    tpu.vector_store %arg2[%c0_2, %c2, %c2_3], %0 {strides = array<i32>} : memref<8x20x20xf32, #tpu.memory_space<vmem>>, vector<8x16x16xf32>,
    %c0_4 = arith.constant 0 : index
    %c0_5 = arith.constant 0 : index
    %c2_6 = arith.constant 2 : index
    %2 = vector.load %arg1[%c0_4, %c0_5, %c2_6] : memref<8x16x16xf32, #tpu.memory_space<vmem>>, vector<8x16x1xf32>
    %c0_7 = arith.constant 0 : index
    %c0_8 = arith.constant 0 : index
    %c1 = arith.constant 1 : index
    %3 = vector.load %arg1[%c0_7, %c0_8, %c1] : memref<8x16x16xf32, #tpu.memory_space<vmem>>, vector<8x16x1xf32>
    %4 = tpu.concatenate %2, %3 in 2 : vector<8x16x1xf32>, vector<8x16x1xf32> -> vector<8x16x2xf32>
    %c0_9 = arith.constant 0 : index
    %c2_10 = arith.constant 2 : index
    %c0_11 = arith.constant 0 : index
    %5 = vector.load %arg2[%c0_9, %c2_10, %c0_11] : memref<8x20x20xf32, #tpu.memory_space<vmem>>, vector<8x16x2xf32>
    tpu.vector_store %arg2[%c0_9, %c2_10, %c0_11], %4 {strides = array<i32>} : memref<8x20x20xf32, #tpu.memory_space<vmem>>, vector<8x16x2xf32>,
    %c0_12 = arith.constant 0 : index
    %c0_13 = arith.constant 0 : index
    %c14 = arith.constant 14 : index
    %6 = vector.load %arg1[%c0_12, %c0_13, %c14] : memref<8x16x16xf32, #tpu.memory_space<vmem>>, vector<8x16x1xf32>
    %c0_14 = arith.constant 0 : index
    %c0_15 = arith.constant 0 : index
    %c13 = arith.constant 13 : index
    %7 = vector.load %arg1[%c0_14, %c0_15, %c13] : memref<8x16x16xf32, #tpu.memory_space<vmem>>, vector<8x16x1xf32>
    %8 = tpu.concatenate %6, %7 in 2 : vector<8x16x1xf32>, vector<8x16x1xf32> -> vector<8x16x2xf32>
    %c0_16 = arith.constant 0 : index
    %c2_17 = arith.constant 2 : index
    %c18 = arith.constant 18 : index
    %9 = vector.load %arg2[%c0_16, %c2_17, %c18] : memref<8x20x20xf32, #tpu.memory_space<vmem>>, vector<8x16x2xf32>
    tpu.vector_store %arg2[%c0_16, %c2_17, %c18], %8 {strides = array<i32>} : memref<8x20x20xf32, #tpu.memory_space<vmem>>, vector<8x16x2xf32>,
    %c0_18 = arith.constant 0 : index
    %c4 = arith.constant 4 : index
    %c0_19 = arith.constant 0 : index
    %10 = vector.load %arg2[%c0_18, %c4, %c0_19] : memref<8x20x20xf32, #tpu.memory_space<vmem>>, vector<8x1x20xf32>
    %c0_20 = arith.constant 0 : index
    %c3 = arith.constant 3 : index
    %c0_21 = arith.constant 0 : index
    %11 = vector.load %arg2[%c0_20, %c3, %c0_21] : memref<8x20x20xf32, #tpu.memory_space<vmem>>, vector<8x1x20xf32>
    %12 = tpu.concatenate %10, %11 in 1 : vector<8x1x20xf32>, vector<8x1x20xf32> -> vector<8x2x20xf32>
    %c0_22 = arith.constant 0 : index
    %c0_23 = arith.constant 0 : index
    %c0_24 = arith.constant 0 : index
    %13 = vector.load %arg2[%c0_22, %c0_23, %c0_24] : memref<8x20x20xf32, #tpu.memory_space<vmem>>, vector<8x2x20xf32>
    tpu.vector_store %arg2[%c0_22, %c0_23, %c0_24], %12 {strides = array<i32>} : memref<8x20x20xf32, #tpu.memory_space<vmem>>, vector<8x2x20xf32>,
    %c0_25 = arith.constant 0 : index
    %c16 = arith.constant 16 : index
    %c0_26 = arith.constant 0 : index
    %14 = vector.load %arg2[%c0_25, %c16, %c0_26] : memref<8x20x20xf32, #tpu.memory_space<vmem>>, vector<8x1x20xf32>
    %c0_27 = arith.constant 0 : index
    %c15 = arith.constant 15 : index
    %c0_28 = arith.constant 0 : index
    %15 = vector.load %arg2[%c0_27, %c15, %c0_28] : memref<8x20x20xf32, #tpu.memory_space<vmem>>, vector<8x1x20xf32>
    %16 = tpu.concatenate %14, %15 in 1 : vector<8x1x20xf32>, vector<8x1x20xf32> -> vector<8x2x20xf32>
    %c0_29 = arith.constant 0 : index
    %c18_30 = arith.constant 18 : index
    %c0_31 = arith.constant 0 : index
    %17 = vector.load %arg2[%c0_29, %c18_30, %c0_31] : memref<8x20x20xf32, #tpu.memory_space<vmem>>, vector<8x2x20xf32>
    tpu.vector_store %arg2[%c0_29, %c18_30, %c0_31], %16 {strides = array<i32>} : memref<8x20x20xf32, #tpu.memory_space<vmem>>, vector<8x2x20xf32>,
    return
  }
  func.func @transform_0(%arg0: i32) -> (i32, i32, i32) {
    %c0_i32 = arith.constant 0 : i32
    %c0_i32_0 = arith.constant 0 : i32
    %c0_i32_1 = arith.constant 0 : i32
    return %arg0, %c0_i32, %c0_i32_0 : i32, i32, i32
  }
  func.func @transform_1(%arg0: i32) -> (i32, i32, i32) {
    %c0_i32 = arith.constant 0 : i32
    %c0_i32_0 = arith.constant 0 : i32
    %c0_i32_1 = arith.constant 0 : i32
    return %arg0, %c0_i32, %c0_i32_0 : i32, i32, i32
  }
}

</mosaic_0001>

<llo_original>
// kernel: tpu_custom_call.1
$region0: #{tpu_custom_call.1}
  #allocation0 [shape = 'u32[]', space=smem, size = 0x4, offset = 0x4, fixed_abs, tag = 'smem constant byte address 0x4 - core index']
  #allocation1 [shape = 'u32[144,128]{1,0:T(1,128)}', space=vmem, size = 0x12000, scoped, tag = 'internal scratch']
  %s0 = inlined_call_operand.hbm [shape: f32[8,16,16], index: 0, kind: input, shape index: {}]
  %s1 = inlined_call_operand.vmem [shape: f32[8,20,20], index: 1, kind: output, shape index: {}]
  %s2 = sld [smem:[#allocation0]]
  $region18: #{tpu_custom_call.1} parent=0
    _
  %s4 = ssub.s32 1, %s2
  %s5 = scalar_select 0, %s4, %s2
  $region1: #{tpu_custom_call.1} parent=0
    #allocation2 [shape = 'u8[65536]{0}', space=vmem, size = 0x10000, scoped, tag = 'input window, operand 0, single buffered']
    #allocation3 [shape = 's32[1]{0}', space=sflag, size = 0x4, scoped, tag = 'scoped memory for tpu_custom_call.1']
    %6 = vsyncpa [#allocation3], 0
    // Predicated region
    $region2: #{tpu_custom_call.1} parent=1 // pred_check
      _
    $region3: #{tpu_custom_call.1} parent=1 // pred_check_branch
      %8 = sbr.rel (0) target = $region5
    $region4: #{tpu_custom_call.1} parent=1 // pred_region
      %s10 = ssub.s32 2048, 2048
      %11 = vsyncadd [#allocation3], %s10
      %s12 = sshll.u32 [#allocation2], 4
      %s13 = int_to_ptr.vmem [resolvable:$true] %s12
      %18 = dma.hbm_to_vmem [thread:$0]  %s0, 2048, %s13, [#allocation3], 128, 128, 8
    $region5: #{tpu_custom_call.1} parent=1 // pred_fallthru
      _
    // Predicated region
    $region6: #{tpu_custom_call.1} parent=1 // pred_check
      _
    $region7: #{tpu_custom_call.1} parent=1 // pred_check_branch
      %20 = sbr.rel (0) target = $region9
    $region8: #{tpu_custom_call.1} parent=1 // pred_region
      %21 = dma.done [#allocation3], 2048
    $region9: #{tpu_custom_call.1} parent=1 // pred_fallthru
      _
    %v22 = vld [vmem:[#allocation2] sm:$0xff]
    %v23 = vld [vmem:[#allocation2 + $0x8] sm:$0xff]
    %v24 = vld [vmem:[#allocation2 + $0x10] sm:$0xff]
    %v25 = vld [vmem:[#allocation2 + $0x18] sm:$0xff]
    %v26 = vld [vmem:[#allocation2 + $0x20] sm:$0xff]
    %v27 = vld [vmem:[#allocation2 + $0x28] sm:$0xff]
    %v28 = vld [vmem:[#allocation2 + $0x30] sm:$0xff]
    %v29 = vld [vmem:[#allocation2 + $0x38] sm:$0xff]
    %v30 = vld [vmem:[#allocation2 + $0x40] sm:$0xff]
    %v31 = vld [vmem:[#allocation2 + $0x48] sm:$0xff]
    %v32 = vld [vmem:[#allocation2 + $0x50] sm:$0xff]
    %v33 = vld [vmem:[#allocation2 + $0x58] sm:$0xff]
    %v34 = vld [vmem:[#allocation2 + $0x60] sm:$0xff]
    %v35 = vld [vmem:[#allocation2 + $0x68] sm:$0xff]
    %v36 = vld [vmem:[#allocation2 + $0x70] sm:$0xff]
    %v37 = vld [vmem:[#allocation2 + $0x78] sm:$0xff]
    %54 = vrot.lane.b32.xlu0 %v22, 2
    %v55 = vpop.permute.xlu0 %54
    %56 = vrot.lane.b32.xlu0 %v23, 2
    %v57 = vpop.permute.xlu0 %56
    %58 = vrot.lane.b32.xlu0 %v24, 2
    %v59 = vpop.permute.xlu0 %58
    %60 = vrot.lane.b32.xlu0 %v25, 2
    %v61 = vpop.permute.xlu0 %60
    %62 = vrot.lane.b32.xlu0 %v26, 2
    %v63 = vpop.permute.xlu0 %62
    %64 = vrot.lane.b32.xlu0 %v27, 2
    %v65 = vpop.permute.xlu0 %64
    %66 = vrot.lane.b32.xlu0 %v28, 2
    %v67 = vpop.permute.xlu0 %66
    %68 = vrot.lane.b32.xlu0 %v29, 2
    %v69 = vpop.permute.xlu0 %68
    %70 = vrot.lane.b32.xlu0 %v30, 2
    %v71 = vpop.permute.xlu0 %70
    %72 = vrot.lane.b32.xlu0 %v31, 2
    %v73 = vpop.permute.xlu0 %72
    %74 = vrot.lane.b32.xlu0 %v32, 2
    %v75 = vpop.permute.xlu0 %74
    %76 = vrot.lane.b32.xlu0 %v33, 2
    %v77 = vpop.permute.xlu0 %76
    %78 = vrot.lane.b32.xlu0 %v34, 2
    %v79 = vpop.permute.xlu0 %78
    %80 = vrot.lane.b32.xlu0 %v35, 2
    %v81 = vpop.permute.xlu0 %80
    %82 = vrot.lane.b32.xlu0 %v36, 2
    %v83 = vpop.permute.xlu0 %82
    %84 = vrot.lane.b32.xlu0 %v37, 2
    %v85 = vpop.permute.xlu0 %84
    %vm102 = vcmask 146448
    %103 = vst.msk [vmem:[%s1 + $0x2] sm:$0xff] %vm102, %v55
    %104 = vst.msk [vmem:[%s1 + $0xa] sm:$0xff] %vm102, %v57
    %105 = vst.msk [vmem:[%s1 + $0x1a] sm:$0xff] %vm102, %v59
    %106 = vst.msk [vmem:[%s1 + $0x22] sm:$0xff] %vm102, %v61
    %107 = vst.msk [vmem:[%s1 + $0x32] sm:$0xff] %vm102, %v63
    %108 = vst.msk [vmem:[%s1 + $0x3a] sm:$0xff] %vm102, %v65
    %109 = vst.msk [vmem:[%s1 + $0x4a] sm:$0xff] %vm102, %v67
    %110 = vst.msk [vmem:[%s1 + $0x52] sm:$0xff] %vm102, %v69
    %111 = vst.msk [vmem:[%s1 + $0x62] sm:$0xff] %vm102, %v71
    %112 = vst.msk [vmem:[%s1 + $0x6a] sm:$0xff] %vm102, %v73
    %113 = vst.msk [vmem:[%s1 + $0x7a] sm:$0xff] %vm102, %v75
    %114 = vst.msk [vmem:[%s1 + $0x82] sm:$0xff] %vm102, %v77
    %115 = vst.msk [vmem:[%s1 + $0x92] sm:$0xff] %vm102, %v79
    %116 = vst.msk [vmem:[%s1 + $0x9a] sm:$0xff] %vm102, %v81
    %117 = vst.msk [vmem:[%s1 + $0xaa] sm:$0xff] %vm102, %v83
    %118 = vst.msk [vmem:[%s1 + $0xb2] sm:$0xff] %vm102, %v85
    %v119 = vld [vmem:[#allocation2] sm:$0xff]
    %v120 = vld [vmem:[#allocation2 + $0x8] sm:$0xff]
    %v121 = vld [vmem:[#allocation2 + $0x10] sm:$0xff]
    %v122 = vld [vmem:[#allocation2 + $0x18] sm:$0xff]
    %v123 = vld [vmem:[#allocation2 + $0x20] sm:$0xff]
    %v124 = vld [vmem:[#allocation2 + $0x28] sm:$0xff]
    %v125 = vld [vmem:[#allocation2 + $0x30] sm:$0xff]
    %v126 = vld [vmem:[#allocation2 + $0x38] sm:$0xff]
    %v127 = vld [vmem:[#allocation2 + $0x40] sm:$0xff]
    %v128 = vld [vmem:[#allocation2 + $0x48] sm:$0xff]
    %v129 = vld [vmem:[#allocation2 + $0x50] sm:$0xff]
    %v130 = vld [vmem:[#allocation2 + $0x58] sm:$0xff]
    %v131 = vld [vmem:[#allocation2 + $0x60] sm:$0xff]
    %v132 = vld [vmem:[#allocation2 + $0x68] sm:$0xff]
    %v133 = vld [vmem:[#allocation2 + $0x70] sm:$0xff]
    %v134 = vld [vmem:[#allocation2 + $0x78] sm:$0xff]
    %151 = vrot.lane.b32.xlu0 %v119, 126
    %v152 = vpop.permute.xlu0 %151
    %153 = vrot.lane.b32.xlu0 %v120, 126
    %v154 = vpop.permute.xlu0 %153
    %155 = vrot.lane.b32.xlu0 %v121, 126
    %v156 = vpop.permute.xlu0 %155
    %157 = vrot.lane.b32.xlu0 %v122, 126
    %v158 = vpop.permute.xlu0 %157
    %159 = vrot.lane.b32.xlu0 %v123, 126
    %v160 = vpop.permute.xlu0 %159
    %161 = vrot.lane.b32.xlu0 %v124, 126
    %v162 = vpop.permute.xlu0 %161
    %163 = vrot.lane.b32.xlu0 %v125, 126
    %v164 = vpop.permute.xlu0 %163
    %165 = vrot.lane.b32.xlu0 %v126, 126
    %v166 = vpop.permute.xlu0 %165
    %167 = vrot.lane.b32.xlu0 %v127, 126
    %v168 = vpop.permute.xlu0 %167
    %169 = vrot.lane.b32.xlu0 %v128, 126
    %v170 = vpop.permute.xlu0 %169
    %171 = vrot.lane.b32.xlu0 %v129, 126
    %v172 = vpop.permute.xlu0 %171
    %173 = vrot.lane.b32.xlu0 %v130, 126
    %v174 = vpop.permute.xlu0 %173
    %175 = vrot.lane.b32.xlu0 %v131, 126
    %v176 = vpop.permute.xlu0 %175
    %177 = vrot.lane.b32.xlu0 %v132, 126
    %v178 = vpop.permute.xlu0 %177
    %179 = vrot.lane.b32.xlu0 %v133, 126
    %v180 = vpop.permute.xlu0 %179
    %181 = vrot.lane.b32.xlu0 %v134, 126
    %v182 = vpop.permute.xlu0 %181
    %vm199 = vcmask 7168
    %v200 = vsel %vm199, %v152, %v119
    %v201 = vsel %vm199, %v154, %v120
    %v202 = vsel %vm199, %v156, %v121
    %v203 = vsel %vm199, %v158, %v122
    %v204 = vsel %vm199, %v160, %v123
    %v205 = vsel %vm199, %v162, %v124
    %v206 = vsel %vm199, %v164, %v125
    %v207 = vsel %vm199, %v166, %v126
    %v208 = vsel %vm199, %v168, %v127
    %v209 = vsel %vm199, %v170, %v128
    %v210 = vsel %vm199, %v172, %v129
    %v211 = vsel %vm199, %v174, %v130
    %v212 = vsel %vm199, %v176, %v131
    %v213 = vsel %vm199, %v178, %v132
    %v214 = vsel %vm199, %v180, %v133
    %v215 = vsel %vm199, %v182, %v134
    %vm216 = vcmask 15360
    %217 = vst.msk [vmem:[%s1 + $0x2] sm:$0xff] %vm216, %v200
    %218 = vst.msk [vmem:[%s1 + $0xa] sm:$0xff] %vm216, %v201
    %219 = vst.msk [vmem:[%s1 + $0x1a] sm:$0xff] %vm216, %v202
    %220 = vst.msk [vmem:[%s1 + $0x22] sm:$0xff] %vm216, %v203
    %221 = vst.msk [vmem:[%s1 + $0x32] sm:$0xff] %vm216, %v204
    %222 = vst.msk [vmem:[%s1 + $0x3a] sm:$0xff] %vm216, %v205
    %223 = vst.msk [vmem:[%s1 + $0x4a] sm:$0xff] %vm216, %v206
    %224 = vst.msk [vmem:[%s1 + $0x52] sm:$0xff] %vm216, %v207
    %225 = vst.msk [vmem:[%s1 + $0x62] sm:$0xff] %vm216, %v208
    %226 = vst.msk [vmem:[%s1 + $0x6a] sm:$0xff] %vm216, %v209
    %227 = vst.msk [vmem:[%s1 + $0x7a] sm:$0xff] %vm216, %v210
    %228 = vst.msk [vmem:[%s1 + $0x82] sm:$0xff] %vm216, %v211
    %229 = vst.msk [vmem:[%s1 + $0x92] sm:$0xff] %vm216, %v212
    %230 = vst.msk [vmem:[%s1 + $0x9a] sm:$0xff] %vm216, %v213
    %231 = vst.msk [vmem:[%s1 + $0xaa] sm:$0xff] %vm216, %v214
    %232 = vst.msk [vmem:[%s1 + $0xb2] sm:$0xff] %vm216, %v215
    %v233 = vld [vmem:[#allocation2] sm:$0xff]
    %v234 = vld [vmem:[#allocation2 + $0x8] sm:$0xff]
    %v235 = vld [vmem:[#allocation2 + $0x10] sm:$0xff]
    %v236 = vld [vmem:[#allocation2 + $0x18] sm:$0xff]
    %v237 = vld [vmem:[#allocation2 + $0x20] sm:$0xff]
    %v238 = vld [vmem:[#allocation2 + $0x28] sm:$0xff]
    %v239 = vld [vmem:[#allocation2 + $0x30] sm:$0xff]
    %v240 = vld [vmem:[#allocation2 + $0x38] sm:$0xff]
    %v241 = vld [vmem:[#allocation2 + $0x40] sm:$0xff]
    %v242 = vld [vmem:[#allocation2 + $0x48] sm:$0xff]
    %v243 = vld [vmem:[#allocation2 + $0x50] sm:$0xff]
    %v244 = vld [vmem:[#allocation2 + $0x58] sm:$0xff]
    %v245 = vld [vmem:[#allocation2 + $0x60] sm:$0xff]
    %v246 = vld [vmem:[#allocation2 + $0x68] sm:$0xff]
    %v247 = vld [vmem:[#allocation2 + $0x70] sm:$0xff]
    %v248 = vld [vmem:[#allocation2 + $0x78] sm:$0xff]
    %265 = vrot.lane.b32.xlu0 %v233, 114
    %v266 = vpop.permute.xlu0 %265
    %267 = vrot.lane.b32.xlu0 %v234, 114
    %v268 = vpop.permute.xlu0 %267
    %269 = vrot.lane.b32.xlu0 %v235, 114
    %v270 = vpop.permute.xlu0 %269
    %271 = vrot.lane.b32.xlu0 %v236, 114
    %v272 = vpop.permute.xlu0 %271
    %273 = vrot.lane.b32.xlu0 %v237, 114
    %v274 = vpop.permute.xlu0 %273
    %275 = vrot.lane.b32.xlu0 %v238, 114
    %v276 = vpop.permute.xlu0 %275
    %277 = vrot.lane.b32.xlu0 %v239, 114
    %v278 = vpop.permute.xlu0 %277
    %279 = vrot.lane.b32.xlu0 %v240, 114
    %v280 = vpop.permute.xlu0 %279
    %281 = vrot.lane.b32.xlu0 %v241, 114
    %v282 = vpop.permute.xlu0 %281
    %283 = vrot.lane.b32.xlu0 %v242, 114
    %v284 = vpop.permute.xlu0 %283
    %285 = vrot.lane.b32.xlu0 %v243, 114
    %v286 = vpop.permute.xlu0 %285
    %287 = vrot.lane.b32.xlu0 %v244, 114
    %v288 = vpop.permute.xlu0 %287
    %289 = vrot.lane.b32.xlu0 %v245, 114
    %v290 = vpop.permute.xlu0 %289
    %291 = vrot.lane.b32.xlu0 %v246, 114
    %v292 = vpop.permute.xlu0 %291
    %293 = vrot.lane.b32.xlu0 %v247, 114
    %v294 = vpop.permute.xlu0 %293
    %295 = vrot.lane.b32.xlu0 %v248, 114
    %v296 = vpop.permute.xlu0 %295
    %313 = vrot.lane.b32.xlu0 %v233, 116
    %v314 = vpop.permute.xlu0 %313
    %315 = vrot.lane.b32.xlu0 %v234, 116
    %v316 = vpop.permute.xlu0 %315
    %317 = vrot.lane.b32.xlu0 %v235, 116
    %v318 = vpop.permute.xlu0 %317
    %319 = vrot.lane.b32.xlu0 %v236, 116
    %v320 = vpop.permute.xlu0 %319
    %321 = vrot.lane.b32.xlu0 %v237, 116
    %v322 = vpop.permute.xlu0 %321
    %323 = vrot.lane.b32.xlu0 %v238, 116
    %v324 = vpop.permute.xlu0 %323
    %325 = vrot.lane.b32.xlu0 %v239, 116
    %v326 = vpop.permute.xlu0 %325
    %327 = vrot.lane.b32.xlu0 %v240, 116
    %v328 = vpop.permute.xlu0 %327
    %329 = vrot.lane.b32.xlu0 %v241, 116
    %v330 = vpop.permute.xlu0 %329
    %331 = vrot.lane.b32.xlu0 %v242, 116
    %v332 = vpop.permute.xlu0 %331
    %333 = vrot.lane.b32.xlu0 %v243, 116
    %v334 = vpop.permute.xlu0 %333
    %335 = vrot.lane.b32.xlu0 %v244, 116
    %v336 = vpop.permute.xlu0 %335
    %337 = vrot.lane.b32.xlu0 %v245, 116
    %v338 = vpop.permute.xlu0 %337
    %339 = vrot.lane.b32.xlu0 %v246, 116
    %v340 = vpop.permute.xlu0 %339
    %341 = vrot.lane.b32.xlu0 %v247, 116
    %v342 = vpop.permute.xlu0 %341
    %343 = vrot.lane.b32.xlu0 %v248, 116
    %v344 = vpop.permute.xlu0 %343
    %v361 = vsel %vm199, %v266, %v314
    %v362 = vsel %vm199, %v268, %v316
    %v363 = vsel %vm199, %v270, %v318
    %v364 = vsel %vm199, %v272, %v320
    %v365 = vsel %vm199, %v274, %v322
    %v366 = vsel %vm199, %v276, %v324
    %v367 = vsel %vm199, %v278, %v326
    %v368 = vsel %vm199, %v280, %v328
    %v369 = vsel %vm199, %v282, %v330
    %v370 = vsel %vm199, %v284, %v332
    %v371 = vsel %vm199, %v286, %v334
    %v372 = vsel %vm199, %v288, %v336
    %v373 = vsel %vm199, %v290, %v338
    %v374 = vsel %vm199, %v292, %v340
    %v375 = vsel %vm199, %v294, %v342
    %v376 = vsel %vm199, %v296, %v344
    %393 = vrot.lane.b32.xlu0 %v361, 18
    %v394 = vpop.permute.xlu0 %393
    %395 = vrot.lane.b32.xlu0 %v362, 18
    %v396 = vpop.permute.xlu0 %395
    %397 = vrot.lane.b32.xlu0 %v363, 18
    %v398 = vpop.permute.xlu0 %397
    %399 = vrot.lane.b32.xlu0 %v364, 18
    %v400 = vpop.permute.xlu0 %399
    %401 = vrot.lane.b32.xlu0 %v365, 18
    %v402 = vpop.permute.xlu0 %401
    %403 = vrot.lane.b32.xlu0 %v366, 18
    %v404 = vpop.permute.xlu0 %403
    %405 = vrot.lane.b32.xlu0 %v367, 18
    %v406 = vpop.permute.xlu0 %405
    %407 = vrot.lane.b32.xlu0 %v368, 18
    %v408 = vpop.permute.xlu0 %407
    %409 = vrot.lane.b32.xlu0 %v369, 18
    %v410 = vpop.permute.xlu0 %409
    %411 = vrot.lane.b32.xlu0 %v370, 18
    %v412 = vpop.permute.xlu0 %411
    %413 = vrot.lane.b32.xlu0 %v371, 18
    %v414 = vpop.permute.xlu0 %413
    %415 = vrot.lane.b32.xlu0 %v372, 18
    %v416 = vpop.permute.xlu0 %415
    %417 = vrot.lane.b32.xlu0 %v373, 18
    %v418 = vpop.permute.xlu0 %417
    %419 = vrot.lane.b32.xlu0 %v374, 18
    %v420 = vpop.permute.xlu0 %419
    %421 = vrot.lane.b32.xlu0 %v375, 18
    %v422 = vpop.permute.xlu0 %421
    %423 = vrot.lane.b32.xlu0 %v376, 18
    %v424 = vpop.permute.xlu0 %423
    %vm441 = vcmask 162960
    %442 = vst.msk [vmem:[%s1 + $0x2] sm:$0xff] %vm441, %v394
    %443 = vst.msk [vmem:[%s1 + $0xa] sm:$0xff] %vm441, %v396
    %444 = vst.msk [vmem:[%s1 + $0x1a] sm:$0xff] %vm441, %v398
    %445 = vst.msk [vmem:[%s1 + $0x22] sm:$0xff] %vm441, %v400
    %446 = vst.msk [vmem:[%s1 + $0x32] sm:$0xff] %vm441, %v402
    %447 = vst.msk [vmem:[%s1 + $0x3a] sm:$0xff] %vm441, %v404
    %448 = vst.msk [vmem:[%s1 + $0x4a] sm:$0xff] %vm441, %v406
    %449 = vst.msk [vmem:[%s1 + $0x52] sm:$0xff] %vm441, %v408
    %450 = vst.msk [vmem:[%s1 + $0x62] sm:$0xff] %vm441, %v410
    %451 = vst.msk [vmem:[%s1 + $0x6a] sm:$0xff] %vm441, %v412
    %452 = vst.msk [vmem:[%s1 + $0x7a] sm:$0xff] %vm441, %v414
    %453 = vst.msk [vmem:[%s1 + $0x82] sm:$0xff] %vm441, %v416
    %454 = vst.msk [vmem:[%s1 + $0x92] sm:$0xff] %vm441, %v418
    %455 = vst.msk [vmem:[%s1 + $0x9a] sm:$0xff] %vm441, %v420
    %456 = vst.msk [vmem:[%s1 + $0xaa] sm:$0xff] %vm441, %v422
    %457 = vst.msk [vmem:[%s1 + $0xb2] sm:$0xff] %vm441, %v424
    %v458 = vld [vmem:[%s1 + $0x4] sm:$0x1]
    %v459 = vld [vmem:[%s1 + $0x1c] sm:$0x1]
    %v460 = vld [vmem:[%s1 + $0x34] sm:$0x1]
    %v461 = vld [vmem:[%s1 + $0x4c] sm:$0x1]
    %v462 = vld [vmem:[%s1 + $0x64] sm:$0x1]
    %v463 = vld [vmem:[%s1 + $0x7c] sm:$0x1]
    %v464 = vld [vmem:[%s1 + $0x94] sm:$0x1]
    %v465 = vld [vmem:[%s1 + $0xac] sm:$0x1]
    %v466 = vld [vmem:[%s1 + $0x3] sm:$0x1]
    %v467 = vld [vmem:[%s1 + $0x1b] sm:$0x1]
    %v468 = vld [vmem:[%s1 + $0x33] sm:$0x1]
    %v469 = vld [vmem:[%s1 + $0x4b] sm:$0x1]
    %v470 = vld [vmem:[%s1 + $0x63] sm:$0x1]
    %v471 = vld [vmem:[%s1 + $0x7b] sm:$0x1]
    %v472 = vld [vmem:[%s1 + $0x93] sm:$0x1]
    %v473 = vld [vmem:[%s1 + $0xab] sm:$0x1]
    %v482 = vrot.slane %v466, 7
    %v483 = vrot.slane %v467, 7
    %v484 = vrot.slane %v468, 7
    %v485 = vrot.slane %v469, 7
    %v486 = vrot.slane %v470, 7
    %v487 = vrot.slane %v471, 7
    %v488 = vrot.slane %v472, 7
    %v489 = vrot.slane %v473, 7
    %vm498 = vcmask 1040384
    %v499 = vsel %vm498, %v458, %v482
    %v500 = vsel %vm498, %v459, %v483
    %v501 = vsel %vm498, %v460, %v484
    %v502 = vsel %vm498, %v461, %v485
    %v503 = vsel %vm498, %v462, %v486
    %v504 = vsel %vm498, %v463, %v487
    %v505 = vsel %vm498, %v464, %v488
    %v506 = vsel %vm498, %v465, %v489
    %vm507 = vcmask 156672
    %508 = vst.msk [vmem:[%s1] sm:$0x3] %vm507, %v499
    %509 = vst.msk [vmem:[%s1 + $0x18] sm:$0x3] %vm507, %v500
    %510 = vst.msk [vmem:[%s1 + $0x30] sm:$0x3] %vm507, %v501
    %511 = vst.msk [vmem:[%s1 + $0x48] sm:$0x3] %vm507, %v502
    %512 = vst.msk [vmem:[%s1 + $0x60] sm:$0x3] %vm507, %v503
    %513 = vst.msk [vmem:[%s1 + $0x78] sm:$0x3] %vm507, %v504
    %514 = vst.msk [vmem:[%s1 + $0x90] sm:$0x3] %vm507, %v505
    %515 = vst.msk [vmem:[%s1 + $0xa8] sm:$0x3] %vm507, %v506
    %v516 = vld [vmem:[%s1 + $0x10] sm:$0x1]
    %v517 = vld [vmem:[%s1 + $0x28] sm:$0x1]
    %v518 = vld [vmem:[%s1 + $0x40] sm:$0x1]
    %v519 = vld [vmem:[%s1 + $0x58] sm:$0x1]
    %v520 = vld [vmem:[%s1 + $0x70] sm:$0x1]
    %v521 = vld [vmem:[%s1 + $0x88] sm:$0x1]
    %v522 = vld [vmem:[%s1 + $0xa0] sm:$0x1]
    %v523 = vld [vmem:[%s1 + $0xb8] sm:$0x1]
    %v524 = vld [vmem:[%s1 + $0xf] sm:$0x1]
    %v525 = vld [vmem:[%s1 + $0x27] sm:$0x1]
    %v526 = vld [vmem:[%s1 + $0x3f] sm:$0x1]
    %v527 = vld [vmem:[%s1 + $0x57] sm:$0x1]
    %v528 = vld [vmem:[%s1 + $0x6f] sm:$0x1]
    %v529 = vld [vmem:[%s1 + $0x87] sm:$0x1]
    %v530 = vld [vmem:[%s1 + $0x9f] sm:$0x1]
    %v531 = vld [vmem:[%s1 + $0xb7] sm:$0x1]
    %v540 = vrot.slane %v524, 7
    %v541 = vrot.slane %v525, 7
    %v542 = vrot.slane %v526, 7
    %v543 = vrot.slane %v527, 7
    %v544 = vrot.slane %v528, 7
    %v545 = vrot.slane %v529, 7
    %v546 = vrot.slane %v530, 7
    %v547 = vrot.slane %v531, 7
    %v556 = vsel %vm498, %v516, %v540
    %v557 = vsel %vm498, %v517, %v541
    %v558 = vsel %vm498, %v518, %v542
    %v559 = vsel %vm498, %v519, %v543
    %v560 = vsel %vm498, %v520, %v544
    %v561 = vsel %vm498, %v521, %v545
    %v562 = vsel %vm498, %v522, %v546
    %v563 = vsel %vm498, %v523, %v547
    %564 = vst.msk [vmem:[%s1 + $0x12] sm:$0x3] %vm507, %v556
    %565 = vst.msk [vmem:[%s1 + $0x2a] sm:$0x3] %vm507, %v557
    %566 = vst.msk [vmem:[%s1 + $0x42] sm:$0x3] %vm507, %v558
    %567 = vst.msk [vmem:[%s1 + $0x5a] sm:$0x3] %vm507, %v559
    %568 = vst.msk [vmem:[%s1 + $0x72] sm:$0x3] %vm507, %v560
    %569 = vst.msk [vmem:[%s1 + $0x8a] sm:$0x3] %vm507, %v561
    %570 = vst.msk [vmem:[%s1 + $0xa2] sm:$0x3] %vm507, %v562
    %571 = vst.msk [vmem:[%s1 + $0xba] sm:$0x3] %vm507, %v563
    // Predicated region
    $region10: #{tpu_custom_call.1} parent=1 // pred_check
      _
    $region11: #{tpu_custom_call.1} parent=1 // pred_check_branch
      %573 = sbr.rel (0) target = $region13
    $region12: #{tpu_custom_call.1} parent=1 // pred_region
      _
    $region13: #{tpu_custom_call.1} parent=1 // pred_fallthru
      _
    // Predicated region
    $region14: #{tpu_custom_call.1} parent=1 // pred_check
      _
    $region15: #{tpu_custom_call.1} parent=1 // pred_check_branch
      %575 = sbr.rel (0) target = $region17
    $region16: #{tpu_custom_call.1} parent=1 // pred_region
      _
    $region17: #{tpu_custom_call.1} parent=1 // pred_fallthru
      _
    %576 = vsyncpa [#allocation3], 1

</llo_original>
